<compile_context>
chip_gen: v7x
topology: tpu7x:2x2x1
jax: 0.10.0
libtpu: 0.0.40
codegen_flags: <defaults>
</compile_context>

<pallas_src>
import numpy as np
import jax
import jax.numpy as jnp
from jax.experimental import pallas as pl
from jax.experimental.pallas import tpu as pltpu

_LANE = 128
_SUBLANE = 8


def _round_up(x: int, m: int) -> int:
    return ((x + m - 1) // m) * m


def _pack_params(weights, biases, num_bins):
    """Packs all (in, out) weights and (1, out) biases into one padded slab.

    Layer i's weight is zero-padded to (round_up(K_i, 8), W_max) and its bias
    to (8, W_max), where K_0 = round_up(x feature dim, 8) and K_i = padded
    out-dim of layer i-1.  Zero weight/bias padding keeps padded activation
    lanes exactly 0, so padded matmuls equal the unpadded reference.  For the
    softmax head the LAST layer's bias padding lanes are set to -1e30 so the
    softmax mask is free (exp underflows to exactly 0 in padded lanes).

    Done once on the host with numpy (hoisted out of the per-call path).
    Returns (packed_np, meta) with meta[i] = (w_row_off, k_in, b_row_off,
    out_pad) as Python ints (static in-kernel slice offsets).
    """
    weights = [np.asarray(w, np.float32) for w in weights]
    biases = [np.asarray(b, np.float32).reshape(1, -1) for b in biases]
    n = len(weights)

    out_pads = [_round_up(w.shape[1], _LANE) for w in weights]
    k_ins = [_round_up(weights[0].shape[0], _SUBLANE)] + out_pads[:-1]
    w_max = max(out_pads)

    blocks, meta, rows = [], [], 0
    for i, (w, b) in enumerate(zip(weights, biases)):
        k_in, out_pad = k_ins[i], out_pads[i]
        w_rows = _round_up(k_in, _SUBLANE)
        w_pad = np.zeros((w_rows, w_max), np.float32)
        w_pad[: w.shape[0], : w.shape[1]] = w
        b_pad = np.zeros((_SUBLANE, w_max), np.float32)
        b_pad[:1, : w.shape[1]] = b
        if i == n - 1 and num_bins > 1:
            # Fold the padded-lane softmax mask into the bias (softmax head
            # only; the regression head keeps zero padding).
            b_pad[:1, w.shape[1]:out_pad] = -1e30
        w_off = rows
        rows += w_rows
        b_off = rows
        rows += _SUBLANE
        blocks.append(w_pad)
        blocks.append(b_pad)
        meta.append((w_off, k_in, b_off, out_pad))
    return np.concatenate(blocks, axis=0), meta


def _make_mlp_kernel(meta, num_bins: int):
    """Fused kernel: all Linear layers + ReLU + softmax epilogue."""
    n_linear = len(meta)

    def kernel(x_ref, p_ref, out_ref):
        h = x_ref[...].astype(jnp.float32)

        for i, (w_off, k_in, b_off, out_pad) in enumerate(meta):
            w = p_ref[w_off:w_off + k_in, :out_pad]   # static, tile-aligned
            b = p_ref[b_off:b_off + 1, :out_pad]
            h = jnp.dot(h, w, preferred_element_type=jnp.float32) + b
            if i < n_linear - 1:
                # ReLU.
                # TODO(synk): nn.Dropout(p=0.5) reproduced in eval mode
                # (identity); training-mode stochastic dropout not emulated.
                h = jnp.maximum(h, 0.0)

        if num_bins > 1:
            # Padded lanes already carry a -1e30 bias -> exp underflows to
            # exactly 0; no iota / where / mask passes needed here.
            m = jnp.max(h, axis=1, keepdims=True)
            e = jnp.exp(h - m)
            denom = jnp.sum(e, axis=1, keepdims=True)
            # EUP approximate reciprocal + 2 Newton-Raphson refinements (VPU):
            # f32-accurate normalization without a divide.
            r = pl.reciprocal(denom, approx=True)
            r = r * (2.0 - denom * r)
            r = r * (2.0 - denom * r)
            out_ref[...] = (e * r).astype(out_ref.dtype)
        else:
            out_ref[...] = h.astype(out_ref.dtype)

    return kernel


def make_mlp_forward(weights, biases, num_bins, *, batch_tile=4096,
                     out_dtype=jnp.float32, trim_output=True,
                     min_grid_steps=2):
    """Packs parameters once and returns a jitted forward(x) callable.

    weights[i]: (in_i, out_i) = transpose of torch nn.Linear.weight.
    biases[i]:  (1, out_i) or (out_i,).
    trim_output=True  -> returns (B, num_bins) (or (B, 1)); convenient, but
                         pays an extra XLA slice pass over the output.
    trim_output=False -> returns the padded (b_pad, 128) lane-dense buffer;
                         cols [0, num_bins) are exact, padded lanes are 0, and
                         no post-kernel HBM round trip is incurred.
    out_dtype=jnp.bfloat16 halves output writeback bytes (in-kernel compute
    stays f32 on every TPU generation).
    """
    packed_np, meta = _pack_params(weights, biases, num_bins)
    packed = jnp.asarray(packed_np)
    feat_pad = meta[0][1]
    out_pad = meta[-1][3]
    out_dim = int(np.asarray(weights[-1]).shape[1])
    slab_bytes = packed_np.size * 4
    kernel = _make_mlp_kernel(meta, num_bins)

    def _forward(x):
        x = jnp.asarray(x, jnp.float32)
        B, feat = x.shape
        if feat > feat_pad:
            raise ValueError("x feature dim larger than packed layer-0 width")
        if feat < feat_pad:   # sublane-align layer-0 slice (zero features)
            x = jnp.pad(x, ((0, 0), (0, feat_pad - feat)))

        # Batch tile: requested tile, clamped to the padded batch, multiple of
        # 8 (f32 sublane).
        b8 = _round_up(B, _SUBLANE)
        bt = max(_SUBLANE, min(_round_up(batch_tile, _SUBLANE), b8))
        # v7x megacore: guarantee >= min_grid_steps grid steps whenever the
        # batch can be split, so both TensorCores get work on the "parallel"
        # batch axis.  (No effect for large B where the grid is already long.)
        if min_grid_steps > 1 and b8 >= min_grid_steps * _SUBLANE:
            bt = min(bt, _round_up(pl.cdiv(b8, min_grid_steps), _SUBLANE))
        b_pad = _round_up(B, bt)
        if b_pad != B:
            x = jnp.pad(x, ((0, b_pad - B), (0, 0)))
        grid = (b_pad // bt,)

        # VMEM footprint (double-buffered; last dim lane-pads to 128 in VMEM,
        # so the narrow x block costs bt*512 B just like the out tile):
        #   2 * bt * round_up(feat_pad,128) * 4   (x tiles)
        # + 2 * bt * out_pad * 4                  (out tiles)
        # + 2 * slab_bytes                        (packed params)
        vmem_est = (2 * bt * _round_up(feat_pad, _LANE) * 4
                    + 2 * bt * out_pad * 4
                    + 2 * slab_bytes)
        vmem_limit = None
        if vmem_est > (12 << 20):   # past v5e's 16 MiB default scoped region
            vmem_limit = min(int(vmem_est * 1.25) + (2 << 20), 100 << 20)

        out = pl.pallas_call(
            kernel,
            out_shape=jax.ShapeDtypeStruct((b_pad, out_pad), out_dtype),
            grid_spec=pltpu.PrefetchScalarGridSpec(
                num_scalar_prefetch=0,
                grid=grid,
                in_specs=[
                    # Batch-tiled activations.
                    pl.BlockSpec((bt, feat_pad), lambda i: (i, 0)),
                    # Single packed parameter slab.  Its block index is
                    # grid-invariant, so Pallas copies it into VMEM once and
                    # does not re-DMA it per grid step; the redundant second
                    # pipeline buffer only costs ~slab_bytes of VMEM.
                    pl.BlockSpec(packed.shape, lambda i: (0, 0)),
                ],
                out_specs=pl.BlockSpec((bt, out_pad), lambda i: (i, 0)),
            ),
            compiler_params=pltpu.CompilerParams(
                # Independent batch tiles -> shardable across TCs on v7x.
                dimension_semantics=("parallel",),
                vmem_limit_bytes=vmem_limit,
            ),
        )(x, packed)

        if trim_output:
            return out[:B, :out_dim]
        return out

    return jax.jit(_forward)


def mlp_forward(x, weights, biases, num_bins, **kwargs):
    """One-shot convenience wrapper (packs params on every call; for hot paths
    build the callable once with make_mlp_forward)."""
    return make_mlp_forward(weights, biases, num_bins, **kwargs)(x)


def _reference_forward(x, weights, biases, num_bins):
    h = jnp.maximum(x @ weights[0] + jnp.reshape(biases[0], (1, -1)), 0.0)
    for w, b in zip(weights[1:-1], biases[1:-1]):
        h = jnp.maximum(h @ w + jnp.reshape(b, (1, -1)), 0.0)  # dropout = id
    logits = h @ weights[-1] + jnp.reshape(biases[-1], (1, -1))
    if num_bins > 1:
        return jax.nn.softmax(logits, axis=1)
    return logits


if __name__ == "__main__":
    key = jax.random.PRNGKey(0)

    def init_params(hidden_sizes, num_bins, key):
        dims = [(hidden_sizes[i - 1], hidden_sizes[i])
                for i in range(1, len(hidden_sizes))]
        dims.append((hidden_sizes[-1], num_bins if num_bins > 1 else 1))
        ws, bs = [], []
        for din, dout in dims:
            key, kw, kb = jax.random.split(key, 3)
            bound = 1.0 / np.sqrt(din)
            ws.append(jax.random.uniform(kw, (din, dout), jnp.float32,
                                         -bound, bound))
            bs.append(jax.random.uniform(kb, (1, dout), jnp.float32,
                                         -bound, bound))
        return ws, bs, key

    # Module config: hidden_sizes = [in_dim, h1, h2], num_bins = 7.
    hidden_sizes = [16, 32, 32]
    num_bins = 7
    batch = 20  # intentionally NOT a multiple of 8 -> exercises padding path

    weights, biases, key = init_params(hidden_sizes, num_bins, key)
    key, kx = jax.random.split(key)
    x = jax.random.normal(kx, (batch, hidden_sizes[0]), jnp.float32)
    ref = _reference_forward(x, weights, biases, num_bins)

    # 1) Default config: params packed once, jitted callable, trimmed output.
    fwd = make_mlp_forward(weights, biases, num_bins)
    out = jax.block_until_ready(fwd(x))
    np.testing.assert_allclose(np.asarray(out), np.asarray(ref),
                               rtol=1e-5, atol=1e-5)
    assert out.shape == (batch, num_bins)

    # 2) Untrimmed padded output (no post-kernel HBM round trip): real columns
    #    are exact, padded lanes are exactly 0.
    fwd_pad = make_mlp_forward(weights, biases, num_bins, trim_output=False)
    out_pad = jax.block_until_ready(fwd_pad(x))
    np.testing.assert_allclose(np.asarray(out_pad[:batch, :num_bins]),
                               np.asarray(ref), rtol=1e-5, atol=1e-5)
    assert float(jnp.max(jnp.abs(out_pad[:batch, num_bins:]))) == 0.0

    # 3) Small tile -> multi-step grid + ragged-batch padding path.
    out2 = jax.block_until_ready(
        mlp_forward(x, weights, biases, num_bins, batch_tile=8))
    np.testing.assert_allclose(np.asarray(out2), np.asarray(ref),
                               rtol=1e-5, atol=1e-5)

    # 4) bf16 output (halves writeback bytes; compute stays f32 in-kernel).
    out_bf16 = jax.block_until_ready(
        make_mlp_forward(weights, biases, num_bins,
                         out_dtype=jnp.bfloat16)(x))
    np.testing.assert_allclose(np.asarray(out_bf16, np.float32),
                               np.asarray(ref), rtol=2e-2, atol=1e-2)

    # 5) Regression head (num_bins == 1 -> no softmax, zero bias padding).
    w1, b1, key = init_params(hidden_sizes, 1, key)
    out3 = jax.block_until_ready(mlp_forward(x, w1, b1, 1))
    ref3 = _reference_forward(x, w1, b1, 1)
    np.testing.assert_allclose(np.asarray(out3), np.asarray(ref3),
                               rtol=1e-5, atol=1e-5)
    assert out3.shape == (batch, 1)

    print("KERNEL_OK")
</pallas_src>

<mosaic_0001>
module attributes {stable_mosaic.version = 11 : i64} {
  func.func @kernel(%arg0: i32, %arg1: memref<16x16xf32, #tpu.memory_space<vmem>>, %arg2: memref<296x128xf32, #tpu.memory_space<vmem>>, %arg3: memref<16x128xf32, #tpu.memory_space<vmem>>) attributes {dimension_semantics = [#tpu.dimension_semantics<parallel>], iteration_bounds = array<i64: 2>, scalar_prefetch = 0 : i64, scratch_operands = 0 : i64, tpu.core_type = #tpu.core_type<tc>, window_params = [{transform_indices = @transform_0, window_bounds = array<i64: 16, 16>}, {pipeline_mode = #tpu.pipeline_mode<synchronous>, transform_indices = @transform_1, window_bounds = array<i64: 296, 128>}, {transform_indices = @transform_2, window_bounds = array<i64: 16, 128>}]} {
    %c0 = arith.constant 0 : index
    %c0_0 = arith.constant 0 : index
    %0 = vector.load %arg1[%c0, %c0_0] : memref<16x16xf32, #tpu.memory_space<vmem>>, vector<16x16xf32>
    %c0_1 = arith.constant 0 : index
    %c0_2 = arith.constant 0 : index
    %1 = vector.load %arg2[%c0_1, %c0_2] : memref<296x128xf32, #tpu.memory_space<vmem>>, vector<16x128xf32>
    %c16 = arith.constant 16 : index
    %c0_3 = arith.constant 0 : index
    %2 = vector.load %arg2[%c16, %c0_3] : memref<296x128xf32, #tpu.memory_space<vmem>>, vector<1x128xf32>
    %cst = arith.constant dense<0.000000e+00> : vector<16x128xf32>
    %3 = tpu.matmul %0, %1, %cst {dimension_numbers = #tpu.dot_dimension_numbers<[1], [0], [0], [1], [0, 0, 1, 1], [], []>} : vector<16x16xf32>, vector<16x128xf32>, vector<16x128xf32> -> vector<16x128xf32>
    %4 = vector.broadcast %2 : vector<1x128xf32> to vector<16x128xf32>
    %5 = arith.addf %3, %4 : vector<16x128xf32>
    %cst_4 = arith.constant 0.000000e+00 : f32
    %6 = vector.broadcast %cst_4 : f32 to vector<16x128xf32>
    %7 = arith.maximumf %5, %6 : vector<16x128xf32>
    %c24 = arith.constant 24 : index
    %c0_5 = arith.constant 0 : index
    %8 = vector.load %arg2[%c24, %c0_5] : memref<296x128xf32, #tpu.memory_space<vmem>>, vector<128x128xf32>
    %c152 = arith.constant 152 : index
    %c0_6 = arith.constant 0 : index
    %9 = vector.load %arg2[%c152, %c0_6] : memref<296x128xf32, #tpu.memory_space<vmem>>, vector<1x128xf32>
    %cst_7 = arith.constant dense<0.000000e+00> : vector<16x128xf32>
    %10 = tpu.matmul %7, %8, %cst_7 {dimension_numbers = #tpu.dot_dimension_numbers<[1], [0], [0], [1], [0, 0, 1, 1], [], []>} : vector<16x128xf32>, vector<128x128xf32>, vector<16x128xf32> -> vector<16x128xf32>
    %11 = vector.broadcast %9 : vector<1x128xf32> to vector<16x128xf32>
    %12 = arith.addf %10, %11 : vector<16x128xf32>
    %cst_8 = arith.constant 0.000000e+00 : f32
    %13 = vector.broadcast %cst_8 : f32 to vector<16x128xf32>
    %14 = arith.maximumf %12, %13 : vector<16x128xf32>
    %c160 = arith.constant 160 : index
    %c0_9 = arith.constant 0 : index
    %15 = vector.load %arg2[%c160, %c0_9] : memref<296x128xf32, #tpu.memory_space<vmem>>, vector<128x128xf32>
    %c288 = arith.constant 288 : index
    %c0_10 = arith.constant 0 : index
    %16 = vector.load %arg2[%c288, %c0_10] : memref<296x128xf32, #tpu.memory_space<vmem>>, vector<1x128xf32>
    %cst_11 = arith.constant dense<0.000000e+00> : vector<16x128xf32>
    %17 = tpu.matmul %14, %15, %cst_11 {dimension_numbers = #tpu.dot_dimension_numbers<[1], [0], [0], [1], [0, 0, 1, 1], [], []>} : vector<16x128xf32>, vector<128x128xf32>, vector<16x128xf32> -> vector<16x128xf32>
    %18 = vector.broadcast %16 : vector<1x128xf32> to vector<16x128xf32>
    %19 = arith.addf %17, %18 : vector<16x128xf32>
    %cst_12 = arith.constant dense<0xFF800000> : vector<16xf32>
    %20 = vector.multi_reduction <maximumf>, %19, %cst_12 [1] : vector<16x128xf32> to vector<16xf32>
    %21 = vector.shape_cast %20 : vector<16xf32> to vector<16x1xf32>
    %22 = vector.broadcast %21 : vector<16x1xf32> to vector<16x128xf32>
    %23 = arith.subf %19, %22 : vector<16x128xf32>
    %24 = math.exp %23 : vector<16x128xf32>
    %cst_13 = arith.constant dense<0.000000e+00> : vector<16xf32>
    %25 = vector.multi_reduction <add>, %24, %cst_13 [1] : vector<16x128xf32> to vector<16xf32>
    %26 = vector.shape_cast %25 : vector<16xf32> to vector<16x1xf32>
    %27 = tpu.reciprocal %26 {approx = true} : vector<16x1xf32> -> vector<16x1xf32>
    %28 = arith.mulf %26, %27 : vector<16x1xf32>
    %cst_14 = arith.constant 2.000000e+00 : f32
    %29 = vector.broadcast %cst_14 : f32 to vector<16x1xf32>
    %30 = arith.subf %29, %28 : vector<16x1xf32>
    %31 = arith.mulf %27, %30 : vector<16x1xf32>
    %32 = arith.mulf %26, %31 : vector<16x1xf32>
    %cst_15 = arith.constant 2.000000e+00 : f32
    %33 = vector.broadcast %cst_15 : f32 to vector<16x1xf32>
    %34 = arith.subf %33, %32 : vector<16x1xf32>
    %35 = arith.mulf %31, %34 : vector<16x1xf32>
    %36 = vector.broadcast %35 : vector<16x1xf32> to vector<16x128xf32>
    %37 = arith.mulf %24, %36 : vector<16x128xf32>
    %c0_16 = arith.constant 0 : index
    %c0_17 = arith.constant 0 : index
    %38 = vector.load %arg3[%c0_16, %c0_17] : memref<16x128xf32, #tpu.memory_space<vmem>>, vector<16x128xf32>
    tpu.vector_store %arg3[%c0_16, %c0_17], %37 {strides = array<i32>} : memref<16x128xf32, #tpu.memory_space<vmem>>, vector<16x128xf32>,
    return
  }
  func.func @transform_0(%arg0: i32) -> (i32, i32) {
    %c0_i32 = arith.constant 0 : i32
    %c0_i32_0 = arith.constant 0 : i32
    return %arg0, %c0_i32 : i32, i32
  }
  func.func @transform_1(%arg0: i32) -> (i32, i32) {
    %c0_i32 = arith.constant 0 : i32
    %c0_i32_0 = arith.constant 0 : i32
    %c0_i32_1 = arith.constant 0 : i32
    return %c0_i32, %c0_i32_0 : i32, i32
  }
  func.func @transform_2(%arg0: i32) -> (i32, i32) {
    %c0_i32 = arith.constant 0 : i32
    %c0_i32_0 = arith.constant 0 : i32
    return %arg0, %c0_i32 : i32, i32
  }
}

</mosaic_0001>

<llo_original>
// kernel: _forward.1
$region0: #{_forward.1}
  #allocation0 [shape = 'u32[]', space=smem, size = 0x4, offset = 0x4, fixed_abs, tag = 'smem constant byte address 0x4 - core index']
  #allocation1 [shape = 'u32[144,128]{1,0:T(1,128)}', space=vmem, size = 0x12000, scoped, tag = 'internal scratch']
  %s0 = inlined_call_operand.vmem [shape: f32[32,16], index: 0, kind: input, shape index: {}]
  %s1 = inlined_call_operand.hbm [shape: f32[296,128], index: 1, kind: input, shape index: {}]
  %s2 = inlined_call_operand.vmem [shape: f32[32,128], index: 2, kind: output, shape index: {}]
  %s3 = sld [smem:[#allocation0]]
  $region45: #{_forward.1} parent=0
    _
  %s5 = ssub.s32 1, %s3
  %s6 = scalar_select 0, %s5, %s3
  $region1: #{_forward.1} parent=0
    #allocation2 [shape = 'u8[151552]{0}', space=vmem, size = 0x25000, scoped, tag = 'input window, operand 1, single buffered']
    #allocation3 [shape = 's32[2]{0}', space=sflag, size = 0x8, scoped, tag = 'scoped memory for _forward.1']
    %7 = vsyncpa [#allocation3], 0
    loop: start=0, step=1, limit=4
    $region2: #{_forward.1} parent=1 // loop_pre_header
      _
    $region3: #{_forward.1} parent=1 // loop_header
      %s9 = sphi 0, %s13
      %p10 = scmp.ge.s32.totalorder %s9, 4
      %s19 = sphi 0, %s21
      %s22 = sphi 0, %s19
      %s23 = sphi 0, %s22
      %s39 = sphi 0, %s23
      %s43 = sphi 0, %s43
      %s45 = sphi 0, %s43
      %s46 = sphi 0, %s45
      %s60 = sphi 0, %s46
      %s66 = sphi 0, %s68
      %s69 = sphi 0, %s66
      %s70 = sphi 0, %s69
      %s86 = sphi 0, %s70
    $region4: #{_forward.1} parent=1 // loop_header_branch
      %12 = sbr.rel (%p10) target = $region8
    $region5: #{_forward.1} parent=1 // loop_body
      %s14 = ssub.s32 %s9, 1
      %s15 = ssub.s32 %s9, 2
      %s16 = sadd.s32 %s9, 1
      %s17 = ssub.s32 %s9, %s16
      %p18 = scmp.eq.s32.totalorder %s17, 0
      %s20 = sadd.s32 %s19, 1
      %s21 = scalar_select %p18, %s19, %s20
      %p24 = pneg %p18
      %p25 = scmp.eq.s32.totalorder %s9, 1
      %p26 = por %p24, %p25
      %p27 = scmp.ne.s32.totalorder %s19, %s22
      %p28 = scmp.eq.s32.totalorder %s9, 0
      %p29 = por %p27, %p28
      %p30 = scmp.ne.s32.totalorder %s19, %s22
      %p31 = scmp.eq.s32.totalorder %s14, 1
      %p32 = por %p30, %p31
      %p33 = scmp.ne.s32.totalorder %s22, %s23
      %p34 = scmp.eq.s32.totalorder %s14, 0
      %p35 = por %p33, %p34
      %p36 = scmp.ne.s32.totalorder %s22, %s23
      %p37 = scmp.eq.s32.totalorder %s15, 1
      %p38 = por %p36, %p37
      %p40 = scmp.ne.s32.totalorder %s23, %s39
      %p41 = scmp.eq.s32.totalorder %s15, 0
      %p42 = por %p40, %p41
      %s44 = sadd.s32 %s43, 1
      %p47 = scmp.eq.s32.totalorder %s9, 1
      %p48 = scmp.ne.s32.totalorder %s43, %s45
      %p49 = scmp.eq.s32.totalorder %s9, 0
      %p50 = por %p48, %p49
      %p51 = scmp.ne.s32.totalorder %s43, %s45
      %p52 = scmp.eq.s32.totalorder %s14, 1
      %p53 = por %p51, %p52
      %p54 = scmp.ne.s32.totalorder %s45, %s46
      %p55 = scmp.eq.s32.totalorder %s14, 0
      %p56 = por %p54, %p55
      %p57 = scmp.ne.s32.totalorder %s45, %s46
      %p58 = scmp.eq.s32.totalorder %s15, 1
      %p59 = por %p57, %p58
      %p61 = scmp.ne.s32.totalorder %s46, %s60
      %p62 = scmp.eq.s32.totalorder %s15, 0
      %p63 = por %p61, %p62
      %s64 = ssub.s32 %s9, %s16
      %p65 = scmp.eq.s32.totalorder %s64, 0
      %s67 = sadd.s32 %s66, 1
      %s68 = scalar_select %p65, %s66, %s67
      %p71 = pneg %p65
      %p72 = scmp.eq.s32.totalorder %s9, 1
      %p73 = por %p71, %p72
      %p74 = scmp.ne.s32.totalorder %s66, %s69
      %p75 = scmp.eq.s32.totalorder %s9, 0
      %p76 = por %p74, %p75
      %p77 = scmp.ne.s32.totalorder %s66, %s69
      %p78 = scmp.eq.s32.totalorder %s14, 1
      %p79 = por %p77, %p78
      %p80 = scmp.ne.s32.totalorder %s69, %s70
      %p81 = scmp.eq.s32.totalorder %s14, 0
      %p82 = por %p80, %p81
      %p83 = scmp.ne.s32.totalorder %s69, %s70
      %p84 = scmp.eq.s32.totalorder %s15, 1
      %p85 = por %p83, %p84
      %p87 = scmp.ne.s32.totalorder %s70, %s86
      %p88 = scmp.eq.s32.totalorder %s15, 0
      %p89 = por %p87, %p88
      %p90 = scmp.le.s32.totalorder 1, %s9
      %p91 = scmp.lt.s32.totalorder %s9, 3
      %p92 = pnand %p90, %p91
      %p93 = pneg %p92
      // Predicated region
      $region9: #{_forward.1} parent=5 // pred_check
        _
      $region10: #{_forward.1} parent=5 // pred_check_branch
        %95 = sbr.rel (%p92) target = $region12
      $region11: #{_forward.1} parent=5 // pred_region
        %s96 = ssub.s32 %s9, 1
        // Predicated region
        $region13: #{_forward.1} parent=11 // pred_check
          %p97 = pneg %p56
        $region14: #{_forward.1} parent=11 // pred_check_branch
          %99 = sbr.rel (%p97) target = $region16
        $region15: #{_forward.1} parent=11 // pred_region
          %s101 = ssub.s32 4736, 4736
          %102 = vsyncadd [#allocation3], %s101
          %s103 = sshll.u32 [#allocation2], 4
          %s104 = int_to_ptr.vmem [resolvable:$true] %s103
          %109 = dma.hbm_to_vmem [thread:$0]  %s1, 4736, %s104, [#allocation3], 128, 128, 8
        $region16: #{_forward.1} parent=11 // pred_fallthru
          _
      $region12: #{_forward.1} parent=5 // pred_fallthru
        _
      %p110 = scmp.lt.s32.totalorder %s9, 2
      // Predicated region
      $region17: #{_forward.1} parent=5 // pred_check
        %p111 = pneg %p110
      $region18: #{_forward.1} parent=5 // pred_check_branch
        %113 = sbr.rel (%p111) target = $region20
      $region19: #{_forward.1} parent=5 // pred_region
        // Predicated region
        $region21: #{_forward.1} parent=19 // pred_check
          %p114 = pneg %p29
        $region22: #{_forward.1} parent=19 // pred_check_branch
          %116 = sbr.rel (%p114) target = $region24
        $region23: #{_forward.1} parent=19 // pred_region
          %s117 = smul.u32 2, %s9
          %p118 = scmp.lt.s32.totalorder %s117, 3
          %s119 = scalar_select %p118, %s117, 3
          %s120 = smul.addr %s119, 8
          %s121 = scalar_lea.vmem %s0, %s120
          %s122 = smul.u32 2, %s9
        $region24: #{_forward.1} parent=19 // pred_fallthru
          _
      $region20: #{_forward.1} parent=5 // pred_fallthru
        _
      %p123 = scmp.le.s32.totalorder 1, %s9
      %p124 = scmp.lt.s32.totalorder %s9, 3
      %p125 = pnand %p123, %p124
      %p126 = pneg %p125
      // Predicated region
      $region25: #{_forward.1} parent=5 // pred_check
        _
      $region26: #{_forward.1} parent=5 // pred_check_branch
        %128 = sbr.rel (%p125) target = $region28
      $region27: #{_forward.1} parent=5 // pred_region
        %s129 = ssub.s32 %s9, 1
        // Predicated region
        $region29: #{_forward.1} parent=27 // pred_check
          %p130 = pneg %p56
        $region30: #{_forward.1} parent=27 // pred_check_branch
          %132 = sbr.rel (%p130) target = $region32
        $region31: #{_forward.1} parent=27 // pred_region
          %133 = dma.done [#allocation3], 4736
        $region32: #{_forward.1} parent=27 // pred_fallthru
          _
        %s134 = smul.u32 2, %s14
        %p135 = scmp.lt.s32.totalorder %s134, 3
        %s136 = scalar_select %p135, %s134, 3
        %s137 = smul.addr %s136, 8
        %s138 = scalar_lea.vmem %s0, %s137
        %p139 = pneg %p35
        %p140 = pneg %p32
        %p141 = pneg %p56
        %p142 = pneg %p53
        %p143 = pneg %p82
        %p144 = pneg %p79
        %s145 = smul.u32 2, %s14
        %p146 = scmp.lt.s32.totalorder %s145, 3
        %s147 = scalar_select %p146, %s145, 3
        %s148 = smul.addr %s147, 8
        %s149 = scalar_lea.vmem %s2, %s148
        %s150 = smul.u32 2, %s14
        %p151 = scmp.lt.s32.totalorder %s150, 3
        %s152 = scalar_select %p151, %s150, 3
        %s153 = smul.addr %s152, 8
        %s154 = scalar_lea.vmem %s0, %s153
        %s155 = smul.u32 2, %s14
        %s156 = smul.u32 2, %s14
        %p157 = scmp.lt.s32.totalorder %s156, 3
        %s158 = scalar_select %p157, %s156, 3
        %s159 = smul.addr %s158, 8
        %s160 = scalar_lea.vmem %s2, %s159
        %s161 = smul.u32 2, %s14
        %v162 = vld [vmem:[%s154] sm:$0xff]
        %v163 = vld [vmem:[%s154 + $0x8] sm:$0xff]
        %v164 = vld [vmem:[#allocation2] sm:$0xff]
        %v165 = vld [vmem:[#allocation2 + $0x8] sm:$0xff]
        %v166 = vld [vmem:[#allocation2 + $0x10] sm:$0x1]
        %v167 = vlaneseq
        %v168 = vshrl.u32 %v167, 7
        %v169 = vsub.s32 0, %v168
        %v170 = vrot.slane %v166, %v169
        %vm171 = vcmask 130048
        %v173 = vsel %vm171, %v162, 0
        %v176 = vsel %vm171, %v163, 0
        %178 = vmatprep.subr.mxu0 0.0
        %179 = vmatpush1.msra.mxu0 %v164
        %180 = vmatprep.subr.mxu0 0.0
        %181 = vmatpush1.msra.mxu0 %v165
        %182 = vmatprep.subr.mxu0 0.0
        %183 = vmatpush1.msra.mxu0 0.0
        %184 = vmatprep.subr.mxu0 0.0
        %185 = vmatpush1.msra.mxu0 0.0
        %186 = vmatprep.subr.mxu0 0.0
        %187 = vmatpush1.msra.mxu0 0.0
        %188 = vmatprep.subr.mxu0 0.0
        %189 = vmatpush1.msra.mxu0 0.0
        %190 = vmatprep.subr.mxu0 0.0
        %191 = vmatpush1.msra.mxu0 0.0
        %192 = vmatprep.subr.mxu0 0.0
        %193 = vmatpush1.msra.mxu0 0.0
        %194 = vmatprep.subr.mxu0 0.0
        %195 = vmatpush1.msra.mxu0 0.0
        %196 = vmatprep.subr.mxu0 0.0
        %197 = vmatpush1.msra.mxu0 0.0
        %198 = vmatprep.subr.mxu0 0.0
        %199 = vmatpush1.msra.mxu0 0.0
        %200 = vmatprep.subr.mxu0 0.0
        %201 = vmatpush1.msra.mxu0 0.0
        %202 = vmatprep.subr.mxu0 0.0
        %203 = vmatpush1.msra.mxu0 0.0
        %204 = vmatprep.subr.mxu0 0.0
        %205 = vmatpush1.msra.mxu0 0.0
        %206 = vmatprep.subr.mxu0 0.0
        %207 = vmatpush1.msra.mxu0 0.0
        %208 = vmatprep.subr.mxu0 0.0
        %209 = vmatpush1.msra.mxu0 0.0
        %210 = vmatprep.subr.mxu0 0.0
        %211 = vmatpush1.msra.mxu0 0.0
        %212 = vmatprep.subr.mxu0 0.0
        %213 = vmatpush1.msra.mxu0 0.0
        %214 = vmatprep.subr.mxu0 0.0
        %215 = vmatpush1.msra.mxu0 0.0
        %216 = vmatprep.subr.mxu0 0.0
        %217 = vmatpush1.msra.mxu0 0.0
        %218 = vmatprep.subr.mxu0 0.0
        %219 = vmatpush1.msra.mxu0 0.0
        %220 = vmatprep.subr.mxu0 0.0
        %221 = vmatpush1.msra.mxu0 0.0
        %222 = vmatprep.subr.mxu0 0.0
        %223 = vmatpush1.msra.mxu0 0.0
        %224 = vmatprep.subr.mxu0 0.0
        %225 = vmatpush1.msra.mxu0 0.0
        %226 = vmatprep.subr.mxu0 0.0
        %227 = vmatpush1.msra.mxu0 0.0
        %228 = vmatprep.subr.mxu0 0.0
        %229 = vmatpush1.msra.mxu0 0.0
        %230 = vmatprep.subr.mxu0 0.0
        %231 = vmatpush1.msra.mxu0 0.0
        %232 = vmatprep.subr.mxu0 0.0
        %233 = vmatpush1.msra.mxu0 0.0
        %234 = vmatprep.subr.mxu0 0.0
        %235 = vmatpush1.msra.mxu0 0.0
        %236 = vmatprep.subr.mxu0 0.0
        %237 = vmatpush1.msra.mxu0 0.0
        %238 = vmatprep.subr.mxu0 0.0
        %239 = vmatpush1.msra.mxu0 0.0
        %240 = vmatprep.subr.mxu0 0.0
        %241 = vmatpush1.msra.mxu0 0.0
        %242 = vmatprep.mubr.f32.mxu0 0.0
        %243 = vmatmul.mubr.f32.gmra.mrb[0].mxu0 %v173
        %v244 = vpop.f32.mrb[0].mxu0
        %v245 = vadd.f32 %v170, %v244
        %v246 = vpop.f32.mrb[0].mxu0
        %247 = vmatprep.mubr.f32.mxu0 0.0
        %248 = vmatmul.mubr.f32.gmra.mrb[0].mxu0 %v176
        %v249 = vpop.f32.mrb[0].mxu0
        %v250 = vadd.f32 %v170, %v249
        %v251 = vpop.f32.mrb[0].mxu0
        %252 = vdwg.mxu0
        %v253 = vmax.f32 %v245, 0.0
        %v254 = vmax.f32 %v250, 0.0
        %v255 = vld [vmem:[#allocation2 + $0x18] sm:$0xff]
        %v256 = vld [vmem:[#allocation2 + $0x20] sm:$0xff]
        %v257 = vld [vmem:[#allocation2 + $0x28] sm:$0xff]
        %v258 = vld [vmem:[#allocation2 + $0x30] sm:$0xff]
        %v259 = vld [vmem:[#allocation2 + $0x38] sm:$0xff]
        %v260 = vld [vmem:[#allocation2 + $0x40] sm:$0xff]
        %v261 = vld [vmem:[#allocation2 + $0x48] sm:$0xff]
        %v262 = vld [vmem:[#allocation2 + $0x50] sm:$0xff]
        %v263 = vld [vmem:[#allocation2 + $0x58] sm:$0xff]
        %v264 = vld [vmem:[#allocation2 + $0x60] sm:$0xff]
        %v265 = vld [vmem:[#allocation2 + $0x68] sm:$0xff]
        %v266 = vld [vmem:[#allocation2 + $0x70] sm:$0xff]
        %v267 = vld [vmem:[#allocation2 + $0x78] sm:$0xff]
        %v268 = vld [vmem:[#allocation2 + $0x80] sm:$0xff]
        %v269 = vld [vmem:[#allocation2 + $0x88] sm:$0xff]
        %v270 = vld [vmem:[#allocation2 + $0x90] sm:$0xff]
        %v271 = vld [vmem:[#allocation2 + $0x98] sm:$0x1]
        %v272 = vlaneseq
        %v273 = vshrl.u32 %v272, 7
        %v274 = vsub.s32 0, %v273
        %v275 = vrot.slane %v271, %v274
        %276 = vmatprep.subr.mxu0 0.0
        %277 = vmatpush1.msra.mxu0 %v255
        %278 = vmatprep.subr.mxu0 0.0
        %279 = vmatpush1.msra.mxu0 %v256
        %280 = vmatprep.subr.mxu0 0.0
        %281 = vmatpush1.msra.mxu0 %v257
        %282 = vmatprep.subr.mxu0 0.0
        %283 = vmatpush1.msra.mxu0 %v258
        %284 = vmatprep.subr.mxu0 0.0
        %285 = vmatpush1.msra.mxu0 %v259
        %286 = vmatprep.subr.mxu0 0.0
        %287 = vmatpush1.msra.mxu0 %v260
        %288 = vmatprep.subr.mxu0 0.0
        %289 = vmatpush1.msra.mxu0 %v261
        %290 = vmatprep.subr.mxu0 0.0
        %291 = vmatpush1.msra.mxu0 %v262
        %292 = vmatprep.subr.mxu0 0.0
        %293 = vmatpush1.msra.mxu0 %v263
        %294 = vmatprep.subr.mxu0 0.0
        %295 = vmatpush1.msra.mxu0 %v264
        %296 = vmatprep.subr.mxu0 0.0
        %297 = vmatpush1.msra.mxu0 %v265
        %298 = vmatprep.subr.mxu0 0.0
        %299 = vmatpush1.msra.mxu0 %v266
        %300 = vmatprep.subr.mxu0 0.0
        %301 = vmatpush1.msra.mxu0 %v267
        %302 = vmatprep.subr.mxu0 0.0
        %303 = vmatpush1.msra.mxu0 %v268
        %304 = vmatprep.subr.mxu0 0.0
        %305 = vmatpush1.msra.mxu0 %v269
        %306 = vmatprep.subr.mxu0 0.0
        %307 = vmatpush1.msra.mxu0 %v270
        %308 = vmatprep.subr.mxu0 0.0
        %309 = vmatpush1.msra.mxu0 0.0
        %310 = vmatprep.subr.mxu0 0.0
        %311 = vmatpush1.msra.mxu0 0.0
        %312 = vmatprep.subr.mxu0 0.0
        %313 = vmatpush1.msra.mxu0 0.0
        %314 = vmatprep.subr.mxu0 0.0
        %315 = vmatpush1.msra.mxu0 0.0
        %316 = vmatprep.subr.mxu0 0.0
        %317 = vmatpush1.msra.mxu0 0.0
        %318 = vmatprep.subr.mxu0 0.0
        %319 = vmatpush1.msra.mxu0 0.0
        %320 = vmatprep.subr.mxu0 0.0
        %321 = vmatpush1.msra.mxu0 0.0
        %322 = vmatprep.subr.mxu0 0.0
        %323 = vmatpush1.msra.mxu0 0.0
        %324 = vmatprep.subr.mxu0 0.0
        %325 = vmatpush1.msra.mxu0 0.0
        %326 = vmatprep.subr.mxu0 0.0
        %327 = vmatpush1.msra.mxu0 0.0
        %328 = vmatprep.subr.mxu0 0.0
        %329 = vmatpush1.msra.mxu0 0.0
        %330 = vmatprep.subr.mxu0 0.0
        %331 = vmatpush1.msra.mxu0 0.0
        %332 = vmatprep.subr.mxu0 0.0
        %333 = vmatpush1.msra.mxu0 0.0
        %334 = vmatprep.subr.mxu0 0.0
        %335 = vmatpush1.msra.mxu0 0.0
        %336 = vmatprep.subr.mxu0 0.0
        %337 = vmatpush1.msra.mxu0 0.0
        %338 = vmatprep.subr.mxu0 0.0
        %339 = vmatpush1.msra.mxu0 0.0
        %340 = vmatprep.mubr.f32.mxu0 0.0
        %341 = vmatmul.mubr.f32.gmra.mrb[0].mxu0 %v253
        %v342 = vpop.f32.mrb[0].mxu0
        %v343 = vadd.f32 %v275, %v342
        %v344 = vpop.f32.mrb[0].mxu0
        %345 = vmatprep.mubr.f32.mxu0 0.0
        %346 = vmatmul.mubr.f32.gmra.mrb[0].mxu0 %v254
        %v347 = vpop.f32.mrb[0].mxu0
        %v348 = vadd.f32 %v275, %v347
        %v349 = vpop.f32.mrb[0].mxu0
        %350 = vdwg.mxu0
        %v351 = vmax.f32 %v343, 0.0
        %v352 = vmax.f32 %v348, 0.0
        %v353 = vld [vmem:[#allocation2 + $0xa0] sm:$0xff]
        %v354 = vld [vmem:[#allocation2 + $0xa8] sm:$0xff]
        %v355 = vld [vmem:[#allocation2 + $0xb0] sm:$0xff]
        %v356 = vld [vmem:[#allocation2 + $0xb8] sm:$0xff]
        %v357 = vld [vmem:[#allocation2 + $0xc0] sm:$0xff]
        %v358 = vld [vmem:[#allocation2 + $0xc8] sm:$0xff]
        %v359 = vld [vmem:[#allocation2 + $0xd0] sm:$0xff]
        %v360 = vld [vmem:[#allocation2 + $0xd8] sm:$0xff]
        %v361 = vld [vmem:[#allocation2 + $0xe0] sm:$0xff]
        %v362 = vld [vmem:[#allocation2 + $0xe8] sm:$0xff]
        %v363 = vld [vmem:[#allocation2 + $0xf0] sm:$0xff]
        %v364 = vld [vmem:[#allocation2 + $0xf8] sm:$0xff]
        %v365 = vld [vmem:[#allocation2 + $0x100] sm:$0xff]
        %v366 = vld [vmem:[#allocation2 + $0x108] sm:$0xff]
        %v367 = vld [vmem:[#allocation2 + $0x110] sm:$0xff]
        %v368 = vld [vmem:[#allocation2 + $0x118] sm:$0xff]
        %v369 = vld [vmem:[#allocation2 + $0x120] sm:$0x1]
        %v370 = vlaneseq
        %v371 = vshrl.u32 %v370, 7
        %v372 = vsub.s32 0, %v371
        %v373 = vrot.slane %v369, %v372
        %374 = vmatprep.subr.mxu0 0.0
        %375 = vmatpush1.msra.mxu0 %v353
        %376 = vmatprep.subr.mxu0 0.0
        %377 = vmatpush1.msra.mxu0 %v354
        %378 = vmatprep.subr.mxu0 0.0
        %379 = vmatpush1.msra.mxu0 %v355
        %380 = vmatprep.subr.mxu0 0.0
        %381 = vmatpush1.msra.mxu0 %v356
        %382 = vmatprep.subr.mxu0 0.0
        %383 = vmatpush1.msra.mxu0 %v357
        %384 = vmatprep.subr.mxu0 0.0
        %385 = vmatpush1.msra.mxu0 %v358
        %386 = vmatprep.subr.mxu0 0.0
        %387 = vmatpush1.msra.mxu0 %v359
        %388 = vmatprep.subr.mxu0 0.0
        %389 = vmatpush1.msra.mxu0 %v360
        %390 = vmatprep.subr.mxu0 0.0
        %391 = vmatpush1.msra.mxu0 %v361
        %392 = vmatprep.subr.mxu0 0.0
        %393 = vmatpush1.msra.mxu0 %v362
        %394 = vmatprep.subr.mxu0 0.0
        %395 = vmatpush1.msra.mxu0 %v363
        %396 = vmatprep.subr.mxu0 0.0
        %397 = vmatpush1.msra.mxu0 %v364
        %398 = vmatprep.subr.mxu0 0.0
        %399 = vmatpush1.msra.mxu0 %v365
        %400 = vmatprep.subr.mxu0 0.0
        %401 = vmatpush1.msra.mxu0 %v366
        %402 = vmatprep.subr.mxu0 0.0
        %403 = vmatpush1.msra.mxu0 %v367
        %404 = vmatprep.subr.mxu0 0.0
        %405 = vmatpush1.msra.mxu0 %v368
        %406 = vmatprep.subr.mxu0 0.0
        %407 = vmatpush1.msra.mxu0 0.0
        %408 = vmatprep.subr.mxu0 0.0
        %409 = vmatpush1.msra.mxu0 0.0
        %410 = vmatprep.subr.mxu0 0.0
        %411 = vmatpush1.msra.mxu0 0.0
        %412 = vmatprep.subr.mxu0 0.0
        %413 = vmatpush1.msra.mxu0 0.0
        %414 = vmatprep.subr.mxu0 0.0
        %415 = vmatpush1.msra.mxu0 0.0
        %416 = vmatprep.subr.mxu0 0.0
        %417 = vmatpush1.msra.mxu0 0.0
        %418 = vmatprep.subr.mxu0 0.0
        %419 = vmatpush1.msra.mxu0 0.0
        %420 = vmatprep.subr.mxu0 0.0
        %421 = vmatpush1.msra.mxu0 0.0
        %422 = vmatprep.subr.mxu0 0.0
        %423 = vmatpush1.msra.mxu0 0.0
        %424 = vmatprep.subr.mxu0 0.0
        %425 = vmatpush1.msra.mxu0 0.0
        %426 = vmatprep.subr.mxu0 0.0
        %427 = vmatpush1.msra.mxu0 0.0
        %428 = vmatprep.subr.mxu0 0.0
        %429 = vmatpush1.msra.mxu0 0.0
        %430 = vmatprep.subr.mxu0 0.0
        %431 = vmatpush1.msra.mxu0 0.0
        %432 = vmatprep.subr.mxu0 0.0
        %433 = vmatpush1.msra.mxu0 0.0
        %434 = vmatprep.subr.mxu0 0.0
        %435 = vmatpush1.msra.mxu0 0.0
        %436 = vmatprep.subr.mxu0 0.0
        %437 = vmatpush1.msra.mxu0 0.0
        %438 = vmatprep.mubr.f32.mxu0 0.0
        %439 = vmatmul.mubr.f32.gmra.mrb[0].mxu0 %v351
        %v440 = vpop.f32.mrb[0].mxu0
        %v441 = vadd.f32 %v373, %v440
        %v442 = vpop.f32.mrb[0].mxu0
        %443 = vmatprep.mubr.f32.mxu0 0.0
        %444 = vmatmul.mubr.f32.gmra.mrb[0].mxu0 %v352
        %v445 = vpop.f32.mrb[0].mxu0
        %v446 = vadd.f32 %v373, %v445
        %v447 = vpop.f32.mrb[0].mxu0
        %448 = vdwg.mxu0
        %449 = vmax.xlane.f32.xlu0 %v441
        %v450 = vpop.xlane.xlu0 %449
        %451 = vmax.xlane.f32.xlu0 %v446
        %v452 = vpop.xlane.xlu0 %451
        %v453 = vsub.f32 %v441, %v450
        %v454 = vsub.f32 %v446, %v452
        %v455 = vmul.f32 %v453, 1.442695
        %v456 = vpow.pop %v455
        %v457 = vmul.f32 %v454, 1.442695
        %v458 = vpow.pop %v457
        %459 = vadd.xlane.f32.xlu0 %v456
        %v460 = vpop.xlane.xlu0 %459
        %461 = vadd.xlane.f32.xlu0 %v458
        %v462 = vpop.xlane.xlu0 %461
        %v463 = vrcp.pop %v460
        %v464 = vrcp.pop %v462
        %v465 = vmul.f32 %v460, %v463
        %v466 = vmul.f32 %v462, %v464
        %v467 = vsub.f32 2.0, %v465
        %v468 = vsub.f32 2.0, %v466
        %v469 = vmul.f32 %v463, %v467
        %v470 = vmul.f32 %v464, %v468
        %v471 = vmul.f32 %v460, %v469
        %v472 = vmul.f32 %v462, %v470
        %v473 = vsub.f32 2.0, %v471
        %v474 = vsub.f32 2.0, %v472
        %v475 = vmul.f32 %v469, %v473
        %v476 = vmul.f32 %v470, %v474
        %v477 = vmul.f32 %v456, %v475
        %v478 = vmul.f32 %v458, %v476
        %479 = vst [vmem:[%s160] sm:$0xff] %v477
        %480 = vst [vmem:[%s160 + $0x8] sm:$0xff] %v478
        %s481 = smul.u32 2, %s14
        %p482 = scmp.lt.s32.totalorder %s481, 3
        %s483 = scalar_select %p482, %s481, 3
        %s484 = smul.addr %s483, 8
        %s485 = scalar_lea.vmem %s2, %s484
        // Predicated region
        $region33: #{_forward.1} parent=27 // pred_check
          %p486 = pneg %p79
        $region34: #{_forward.1} parent=27 // pred_check_branch
          %488 = sbr.rel (%p486) target = $region36
        $region35: #{_forward.1} parent=27 // pred_region
          %s489 = smul.u32 2, %s14
        $region36: #{_forward.1} parent=27 // pred_fallthru
          _
      $region28: #{_forward.1} parent=5 // pred_fallthru
        _
      %p490 = scmp.le.s32.totalorder 2, %s9
      // Predicated region
      $region37: #{_forward.1} parent=5 // pred_check
        %p491 = pneg %p490
      $region38: #{_forward.1} parent=5 // pred_check_branch
        %493 = sbr.rel (%p491) target = $region40
      $region39: #{_forward.1} parent=5 // pred_region
        %s494 = ssub.s32 %s9, 2
        // Predicated region
        $region41: #{_forward.1} parent=39 // pred_check
          %p495 = pneg %p85
        $region42: #{_forward.1} parent=39 // pred_check_branch
          %497 = sbr.rel (%p495) target = $region44
        $region43: #{_forward.1} parent=39 // pred_region
          %s498 = smul.u32 2, %s15
          %p499 = scmp.lt.s32.totalorder %s498, 3
          %s500 = scalar_select %p499, %s498, 3
          %s501 = smul.addr %s500, 8
          %s502 = scalar_lea.vmem %s2, %s501
        $region44: #{_forward.1} parent=39 // pred_fallthru
          _
      $region40: #{_forward.1} parent=5 // pred_fallthru
        _
    $region6: #{_forward.1} parent=1 // loop_footer
      %s13 = sadd.s32 1, %s9
    $region7: #{_forward.1} parent=1 // loop_footer_branch
      %8 = sbr.rel target = $region3
    $region8: #{_forward.1} parent=1 // loop_exit
      _
    %503 = vsyncpa [#allocation3], 1
    %s504 = scalar_lea.sflag [#allocation3], 1
    %505 = vsyncpa %s504, 1

</llo_original>
